<compile_context>
chip_gen: v7x
topology: tpu7x:2x2x1
jax: 0.10.0
libtpu: 0.0.40
codegen_flags: <defaults>
</compile_context>

<pallas_src>
import jax
import jax.numpy as jnp
from jax.experimental import pallas as pl
from jax.experimental.pallas import tpu as pltpu

H_OUT = 3  # module-level constant `H` in the PyTorch file


def _round_up(x, m):
    return ((x + m - 1) // m) * m


def _cdiv(a, b):
    return -(-a // b)


def _mlp_kernel(x_ref, w1_ref, b1_ref, w2_ref, b2_ref, w4_ref, b4_ref, o_ref):
    bf16 = jnp.bfloat16
    # fc1: cast x to bf16 in-kernel (free VPU cast), MXU matmul, f32 accumulate.
    h = jnp.dot(x_ref[...].astype(bf16), w1_ref[...],
                preferred_element_type=jnp.float32)
    h = jnp.maximum(h + b1_ref[...], 0.0)
    # fc2
    h = jnp.dot(h.astype(bf16), w2_ref[...], preferred_element_type=jnp.float32)
    h = jnp.maximum(h + b2_ref[...], 0.0)
    # fc4 -> (tm, 3); small masked store, but the store slot has huge slack here.
    o = jnp.dot(h.astype(bf16), w4_ref[...], preferred_element_type=jnp.float32)
    o_ref[...] = (o + b4_ref[...]).astype(o_ref.dtype)


def prepare_params(params):
    """One-time parameter prep (hoisted out of the per-call path): bf16 MXU
    weights, f32 biases."""
    return {
        "w1": params["w1"].astype(jnp.bfloat16),
        "b1": params["b1"].astype(jnp.float32),
        "w2": params["w2"].astype(jnp.bfloat16),
        "b2": params["b2"].astype(jnp.float32),
        "w4": params["w4"].astype(jnp.bfloat16),
        "b4": params["b4"].astype(jnp.float32),
    }


def _pick_tm(B, tm):
    """Row tile: multiple of 16; cap 2048; force >=2 (even) grid steps when
    possible so v7x's two TensorCores both get work."""
    if tm is not None:
        return max(16, min(_round_up(tm, 16), _round_up(B, 16)))
    cap = 2048
    if B <= 16:
        return 16
    steps = max(2, _cdiv(B, cap))
    steps += steps % 2  # even step count -> balanced megacore split
    return max(16, _round_up(_cdiv(B, steps), 16))


def feedforward_pallas(x, prep, *, tm=None):
    """x: [B, input_size] float32. prep: dict from prepare_params()."""
    B, in_dim = x.shape
    hidden = prep["w1"].shape[1]
    tm = _pick_tm(B, tm)
    grid = (pl.cdiv(B, tm),)

    # Constant-index blocks: fetched once, resident across all row tiles.
    full = lambda shape: pl.BlockSpec(shape, lambda i: (0,) * len(shape))

    out = pl.pallas_call(
        _mlp_kernel,
        out_shape=jax.ShapeDtypeStruct((B, H_OUT), jnp.float32),
        grid_spec=pltpu.PrefetchScalarGridSpec(
            num_scalar_prefetch=0,
            grid=grid,
            in_specs=[
                pl.BlockSpec((tm, in_dim), lambda i: (i, 0)),  # x row tile (f32)
                full((in_dim, hidden)), full((1, hidden)),     # w1, b1
                full((hidden, hidden)), full((1, hidden)),     # w2, b2
                full((hidden, H_OUT)), full((1, H_OUT)),       # w4, b4
            ],
            out_specs=pl.BlockSpec((tm, H_OUT), lambda i: (i, 0)),
        ),
        compiler_params=pltpu.CompilerParams(
            # Row grid is embarrassingly parallel -> shards across the 2
            # TensorCores on v7x; harmless single-core loop on v5e/v6e.
            dimension_semantics=("parallel",),
        ),
    )(x.astype(jnp.float32), prep["w1"], prep["b1"],
      prep["w2"], prep["b2"], prep["w4"], prep["b4"])

    return out.astype(x.dtype)


def feedforward(x, params, *, tm=None, min_pallas_batch=128, prepared=None):
    """Dispatch: tiny batches are pure launch overhead for a custom kernel, so
    let XLA fuse them; use the Pallas kernel once the row grid amortizes."""
    if x.shape[0] < min_pallas_batch:
        return feedforward_ref(x, params)
    prep = prepared if prepared is not None else prepare_params(params)
    return feedforward_pallas(x, prep, tm=tm)


def init_params(key, input_size, hidden_size):
    """Deterministic init mimicking torch.nn.Linear (uniform +-1/sqrt(fan_in)).
    Weights stored as [in, out]; biases as [1, out] for 2D TPU layouts."""
    k1, k2, k3, k4, k5, k6 = jax.random.split(key, 6)

    def u(k, shape, fan_in):
        bound = 1.0 / jnp.sqrt(fan_in)
        return jax.random.uniform(k, shape, jnp.float32, -bound, bound)

    return {
        "w1": u(k1, (input_size, hidden_size), input_size),
        "b1": u(k2, (1, hidden_size), input_size),
        "w2": u(k3, (hidden_size, hidden_size), hidden_size),
        "b2": u(k4, (1, hidden_size), hidden_size),
        "w4": u(k5, (hidden_size, H_OUT), hidden_size),
        "b4": u(k6, (1, H_OUT), hidden_size),
    }


def feedforward_ref(x, p):
    """Pure-f32 reference (matches the PyTorch module's semantics)."""
    h = jnp.maximum(x @ p["w1"] + p["b1"], 0.0)
    h = jnp.maximum(h @ p["w2"] + p["b2"], 0.0)
    return h @ p["w4"] + p["b4"]


def feedforward_ref_bf16(x, p):
    """Reference replicating the kernel's numerics: bf16 MXU operands,
    f32 accumulation, f32 bias/ReLU."""
    bf, f32 = jnp.bfloat16, jnp.float32
    h = jnp.dot(x.astype(bf), p["w1"].astype(bf), preferred_element_type=f32)
    h = jnp.maximum(h + p["b1"], 0.0)
    h = jnp.dot(h.astype(bf), p["w2"].astype(bf), preferred_element_type=f32)
    h = jnp.maximum(h + p["b2"], 0.0)
    o = jnp.dot(h.astype(bf), p["w4"].astype(bf), preferred_element_type=f32)
    return o + p["b4"]


if __name__ == "__main__":
    key = jax.random.PRNGKey(0)
    kx, kp = jax.random.split(key)

    # Small shapes consistent with the module; B=200 -> a 2-step row grid
    # (exercises pipelining, megacore split, and a ragged masked final tile).
    batch, input_size, hidden_size = 200, 16, 32
    params = init_params(kp, input_size, hidden_size)
    prep = prepare_params(params)   # one-time cast, reused across calls
    x = jax.random.normal(kx, (batch, input_size), jnp.float32)

    out = jax.block_until_ready(feedforward_pallas(x, prep))
    assert out.shape == (batch, H_OUT)

    # Correctness vs. a reference with identical (bf16-MXU / f32-acc) numerics,
    # and a looser check against the pure-f32 module semantics.
    ref_bf16 = feedforward_ref_bf16(x, params)
    assert jnp.allclose(out, ref_bf16, atol=1e-3, rtol=1e-3)
    assert jnp.allclose(out, feedforward_ref(x, params), atol=3e-2, rtol=3e-2)

    # Explicit small-tile call: multi-step grid with a masked tail tile.
    out2 = jax.block_until_ready(feedforward_pallas(x, prep, tm=64))
    assert jnp.allclose(out2, ref_bf16, atol=1e-3, rtol=1e-3)

    # Tiny-batch path dispatches to plain XLA and matches the f32 reference.
    x_small = x[:8]
    out_small = jax.block_until_ready(feedforward(x_small, params))
    assert jnp.allclose(out_small, feedforward_ref(x_small, params),
                        atol=1e-5, rtol=1e-5)

    print("KERNEL_OK")
</pallas_src>

<mosaic_0001>
module attributes {stable_mosaic.version = 11 : i64} {
  func.func @_mlp_kernel(%arg0: i32, %arg1: memref<112x16xf32, #tpu.memory_space<vmem>>, %arg2: memref<16x32xbf16, #tpu.memory_space<vmem>>, %arg3: memref<1x32xf32, #tpu.memory_space<vmem>>, %arg4: memref<32x32xbf16, #tpu.memory_space<vmem>>, %arg5: memref<1x32xf32, #tpu.memory_space<vmem>>, %arg6: memref<32x3xbf16, #tpu.memory_space<vmem>>, %arg7: memref<1x3xf32, #tpu.memory_space<vmem>>, %arg8: memref<112x3xf32, #tpu.memory_space<vmem>>) attributes {dimension_semantics = [#tpu.dimension_semantics<parallel>], iteration_bounds = array<i64: 2>, scalar_prefetch = 0 : i64, scratch_operands = 0 : i64, tpu.core_type = #tpu.core_type<tc>, window_params = [{transform_indices = @transform_0, window_bounds = array<i64: 112, 16>}, {pipeline_mode = #tpu.pipeline_mode<synchronous>, transform_indices = @transform_1, window_bounds = array<i64: 16, 32>}, {pipeline_mode = #tpu.pipeline_mode<synchronous>, transform_indices = @transform_2, window_bounds = array<i64: 1, 32>}, {pipeline_mode = #tpu.pipeline_mode<synchronous>, transform_indices = @transform_3, window_bounds = array<i64: 32, 32>}, {pipeline_mode = #tpu.pipeline_mode<synchronous>, transform_indices = @transform_4, window_bounds = array<i64: 1, 32>}, {pipeline_mode = #tpu.pipeline_mode<synchronous>, transform_indices = @transform_5, window_bounds = array<i64: 32, 3>}, {pipeline_mode = #tpu.pipeline_mode<synchronous>, transform_indices = @transform_6, window_bounds = array<i64: 1, 3>}, {transform_indices = @transform_7, window_bounds = array<i64: 112, 3>}]} {
    %c0 = arith.constant 0 : index
    %c0_0 = arith.constant 0 : index
    %0 = vector.load %arg1[%c0, %c0_0] : memref<112x16xf32, #tpu.memory_space<vmem>>, vector<112x16xf32>
    %1 = arith.truncf %0 : vector<112x16xf32> to vector<112x16xbf16>
    %c0_1 = arith.constant 0 : index
    %c0_2 = arith.constant 0 : index
    %2 = vector.load %arg2[%c0_1, %c0_2] : memref<16x32xbf16, #tpu.memory_space<vmem>>, vector<16x32xbf16>
    %cst = arith.constant dense<0.000000e+00> : vector<112x32xf32>
    %3 = tpu.matmul %1, %2, %cst {dimension_numbers = #tpu.dot_dimension_numbers<[1], [0], [0], [1], [0, 0, 1, 1], [], []>} : vector<112x16xbf16>, vector<16x32xbf16>, vector<112x32xf32> -> vector<112x32xf32>
    %c0_3 = arith.constant 0 : index
    %c0_4 = arith.constant 0 : index
    %4 = vector.load %arg3[%c0_3, %c0_4] : memref<1x32xf32, #tpu.memory_space<vmem>>, vector<1x32xf32>
    %5 = vector.broadcast %4 : vector<1x32xf32> to vector<112x32xf32>
    %6 = arith.addf %3, %5 : vector<112x32xf32>
    %cst_5 = arith.constant 0.000000e+00 : f32
    %7 = vector.broadcast %cst_5 : f32 to vector<112x32xf32>
    %8 = arith.maximumf %6, %7 : vector<112x32xf32>
    %9 = arith.truncf %8 : vector<112x32xf32> to vector<112x32xbf16>
    %c0_6 = arith.constant 0 : index
    %c0_7 = arith.constant 0 : index
    %10 = vector.load %arg4[%c0_6, %c0_7] : memref<32x32xbf16, #tpu.memory_space<vmem>>, vector<32x32xbf16>
    %cst_8 = arith.constant dense<0.000000e+00> : vector<112x32xf32>
    %11 = tpu.matmul %9, %10, %cst_8 {dimension_numbers = #tpu.dot_dimension_numbers<[1], [0], [0], [1], [0, 0, 1, 1], [], []>} : vector<112x32xbf16>, vector<32x32xbf16>, vector<112x32xf32> -> vector<112x32xf32>
    %c0_9 = arith.constant 0 : index
    %c0_10 = arith.constant 0 : index
    %12 = vector.load %arg5[%c0_9, %c0_10] : memref<1x32xf32, #tpu.memory_space<vmem>>, vector<1x32xf32>
    %13 = vector.broadcast %12 : vector<1x32xf32> to vector<112x32xf32>
    %14 = arith.addf %11, %13 : vector<112x32xf32>
    %cst_11 = arith.constant 0.000000e+00 : f32
    %15 = vector.broadcast %cst_11 : f32 to vector<112x32xf32>
    %16 = arith.maximumf %14, %15 : vector<112x32xf32>
    %17 = arith.truncf %16 : vector<112x32xf32> to vector<112x32xbf16>
    %c0_12 = arith.constant 0 : index
    %c0_13 = arith.constant 0 : index
    %18 = vector.load %arg6[%c0_12, %c0_13] : memref<32x3xbf16, #tpu.memory_space<vmem>>, vector<32x3xbf16>
    %cst_14 = arith.constant dense<0.000000e+00> : vector<112x3xf32>
    %19 = tpu.matmul %17, %18, %cst_14 {dimension_numbers = #tpu.dot_dimension_numbers<[1], [0], [0], [1], [0, 0, 1, 1], [], []>} : vector<112x32xbf16>, vector<32x3xbf16>, vector<112x3xf32> -> vector<112x3xf32>
    %c0_15 = arith.constant 0 : index
    %c0_16 = arith.constant 0 : index
    %20 = vector.load %arg7[%c0_15, %c0_16] : memref<1x3xf32, #tpu.memory_space<vmem>>, vector<1x3xf32>
    %21 = vector.broadcast %20 : vector<1x3xf32> to vector<112x3xf32>
    %22 = arith.addf %19, %21 : vector<112x3xf32>
    %c0_17 = arith.constant 0 : index
    %c0_18 = arith.constant 0 : index
    %23 = vector.load %arg8[%c0_17, %c0_18] : memref<112x3xf32, #tpu.memory_space<vmem>>, vector<112x3xf32>
    tpu.vector_store %arg8[%c0_17, %c0_18], %22 {strides = array<i32>} : memref<112x3xf32, #tpu.memory_space<vmem>>, vector<112x3xf32>,
    return
  }
  func.func @transform_0(%arg0: i32) -> (i32, i32) {
    %c0_i32 = arith.constant 0 : i32
    %c0_i32_0 = arith.constant 0 : i32
    return %arg0, %c0_i32 : i32, i32
  }
  func.func @transform_1(%arg0: i32) -> (i32, i32) {
    %c0_i32 = arith.constant 0 : i32
    %c0_i32_0 = arith.constant 0 : i32
    %c0_i32_1 = arith.constant 0 : i32
    return %c0_i32, %c0_i32_0 : i32, i32
  }
  func.func @transform_2(%arg0: i32) -> (i32, i32) {
    %c0_i32 = arith.constant 0 : i32
    %c0_i32_0 = arith.constant 0 : i32
    %c0_i32_1 = arith.constant 0 : i32
    return %c0_i32, %c0_i32_0 : i32, i32
  }
  func.func @transform_3(%arg0: i32) -> (i32, i32) {
    %c0_i32 = arith.constant 0 : i32
    %c0_i32_0 = arith.constant 0 : i32
    %c0_i32_1 = arith.constant 0 : i32
    return %c0_i32, %c0_i32_0 : i32, i32
  }
  func.func @transform_4(%arg0: i32) -> (i32, i32) {
    %c0_i32 = arith.constant 0 : i32
    %c0_i32_0 = arith.constant 0 : i32
    %c0_i32_1 = arith.constant 0 : i32
    return %c0_i32, %c0_i32_0 : i32, i32
  }
  func.func @transform_5(%arg0: i32) -> (i32, i32) {
    %c0_i32 = arith.constant 0 : i32
    %c0_i32_0 = arith.constant 0 : i32
    %c0_i32_1 = arith.constant 0 : i32
    return %c0_i32, %c0_i32_0 : i32, i32
  }
  func.func @transform_6(%arg0: i32) -> (i32, i32) {
    %c0_i32 = arith.constant 0 : i32
    %c0_i32_0 = arith.constant 0 : i32
    %c0_i32_1 = arith.constant 0 : i32
    return %c0_i32, %c0_i32_0 : i32, i32
  }
  func.func @transform_7(%arg0: i32) -> (i32, i32) {
    %c0_i32 = arith.constant 0 : i32
    %c0_i32_0 = arith.constant 0 : i32
    return %arg0, %c0_i32 : i32, i32
  }
}

</mosaic_0001>

<llo_original>
// kernel: tpu_custom_call.1
$region0: #{tpu_custom_call.1}
  #allocation0 [shape = 'u32[]', space=smem, size = 0x4, offset = 0x4, fixed_abs, tag = 'smem constant byte address 0x4 - core index']
  #allocation1 [shape = 'u32[144,128]{1,0:T(1,128)}', space=vmem, size = 0x12000, scoped, tag = 'internal scratch']
  %s0 = inlined_call_operand.vmem [shape: f32[200,16], index: 0, kind: input, shape index: {}]
  %s1 = inlined_call_operand.vmem [shape: bf16[16,32], index: 1, kind: input, shape index: {}]
  %s2 = inlined_call_operand.vmem [shape: f32[1,32], index: 2, kind: input, shape index: {}]
  %s3 = inlined_call_operand.vmem [shape: bf16[32,32], index: 3, kind: input, shape index: {}]
  %s4 = inlined_call_operand.vmem [shape: f32[1,32], index: 4, kind: input, shape index: {}]
  %s5 = inlined_call_operand.vmem [shape: bf16[32,3], index: 5, kind: input, shape index: {}]
  %s6 = inlined_call_operand.vmem [shape: f32[1,3], index: 6, kind: input, shape index: {}]
  %s7 = inlined_call_operand.vmem [shape: f32[200,3], index: 7, kind: output, shape index: {}]
  %s8 = sld [smem:[#allocation0]]
  $region109: #{tpu_custom_call.1} parent=0
    _
  %s10 = ssub.s32 1, %s8
  %s11 = scalar_select 0, %s10, %s8
  $region1: #{tpu_custom_call.1} parent=0
    #allocation2 [shape = 'u8[114688]{0}', space=vmem, size = 0x1c000, scoped, tag = 'output window, operand 0']
    loop: start=0, step=1, limit=4
    $region2: #{tpu_custom_call.1} parent=1 // loop_pre_header
      _
    $region3: #{tpu_custom_call.1} parent=1 // loop_header
      %s13 = sphi 0, %s17
      %p14 = scmp.ge.s32.totalorder %s13, 4
      %s23 = sphi 0, %s25
      %s26 = sphi 0, %s23
      %s27 = sphi 0, %s26
      %s43 = sphi 0, %s27
      %s47 = sphi 0, %s47
      %s49 = sphi 0, %s47
      %s50 = sphi 0, %s49
      %s64 = sphi 0, %s50
      %s68 = sphi 0, %s68
      %s70 = sphi 0, %s68
      %s71 = sphi 0, %s70
      %s85 = sphi 0, %s71
      %s89 = sphi 0, %s89
      %s91 = sphi 0, %s89
      %s92 = sphi 0, %s91
      %s106 = sphi 0, %s92
      %s110 = sphi 0, %s110
      %s112 = sphi 0, %s110
      %s113 = sphi 0, %s112
      %s127 = sphi 0, %s113
      %s131 = sphi 0, %s131
      %s133 = sphi 0, %s131
      %s134 = sphi 0, %s133
      %s148 = sphi 0, %s134
      %s152 = sphi 0, %s152
      %s154 = sphi 0, %s152
      %s155 = sphi 0, %s154
      %s169 = sphi 0, %s155
      %s175 = sphi 0, %s177
      %s178 = sphi 0, %s175
      %s179 = sphi 0, %s178
      %s195 = sphi 0, %s179
    $region4: #{tpu_custom_call.1} parent=1 // loop_header_branch
      %16 = sbr.rel (%p14) target = $region8
    $region5: #{tpu_custom_call.1} parent=1 // loop_body
      %s18 = ssub.s32 %s13, 1
      %s19 = ssub.s32 %s13, 2
      %s20 = sadd.s32 %s13, 1
      %s21 = ssub.s32 %s13, %s20
      %p22 = scmp.eq.s32.totalorder %s21, 0
      %s24 = sadd.s32 %s23, 1
      %s25 = scalar_select %p22, %s23, %s24
      %p28 = pneg %p22
      %p29 = scmp.eq.s32.totalorder %s13, 1
      %p30 = por %p28, %p29
      %p31 = scmp.ne.s32.totalorder %s23, %s26
      %p32 = scmp.eq.s32.totalorder %s13, 0
      %p33 = por %p31, %p32
      %p34 = scmp.ne.s32.totalorder %s23, %s26
      %p35 = scmp.eq.s32.totalorder %s18, 1
      %p36 = por %p34, %p35
      %p37 = scmp.ne.s32.totalorder %s26, %s27
      %p38 = scmp.eq.s32.totalorder %s18, 0
      %p39 = por %p37, %p38
      %p40 = scmp.ne.s32.totalorder %s26, %s27
      %p41 = scmp.eq.s32.totalorder %s19, 1
      %p42 = por %p40, %p41
      %p44 = scmp.ne.s32.totalorder %s27, %s43
      %p45 = scmp.eq.s32.totalorder %s19, 0
      %p46 = por %p44, %p45
      %s48 = sadd.s32 %s47, 1
      %p51 = scmp.eq.s32.totalorder %s13, 1
      %p52 = scmp.ne.s32.totalorder %s47, %s49
      %p53 = scmp.eq.s32.totalorder %s13, 0
      %p54 = por %p52, %p53
      %p55 = scmp.ne.s32.totalorder %s47, %s49
      %p56 = scmp.eq.s32.totalorder %s18, 1
      %p57 = por %p55, %p56
      %p58 = scmp.ne.s32.totalorder %s49, %s50
      %p59 = scmp.eq.s32.totalorder %s18, 0
      %p60 = por %p58, %p59
      %p61 = scmp.ne.s32.totalorder %s49, %s50
      %p62 = scmp.eq.s32.totalorder %s19, 1
      %p63 = por %p61, %p62
      %p65 = scmp.ne.s32.totalorder %s50, %s64
      %p66 = scmp.eq.s32.totalorder %s19, 0
      %p67 = por %p65, %p66
      %s69 = sadd.s32 %s68, 1
      %p72 = scmp.eq.s32.totalorder %s13, 1
      %p73 = scmp.ne.s32.totalorder %s68, %s70
      %p74 = scmp.eq.s32.totalorder %s13, 0
      %p75 = por %p73, %p74
      %p76 = scmp.ne.s32.totalorder %s68, %s70
      %p77 = scmp.eq.s32.totalorder %s18, 1
      %p78 = por %p76, %p77
      %p79 = scmp.ne.s32.totalorder %s70, %s71
      %p80 = scmp.eq.s32.totalorder %s18, 0
      %p81 = por %p79, %p80
      %p82 = scmp.ne.s32.totalorder %s70, %s71
      %p83 = scmp.eq.s32.totalorder %s19, 1
      %p84 = por %p82, %p83
      %p86 = scmp.ne.s32.totalorder %s71, %s85
      %p87 = scmp.eq.s32.totalorder %s19, 0
      %p88 = por %p86, %p87
      %s90 = sadd.s32 %s89, 1
      %p93 = scmp.eq.s32.totalorder %s13, 1
      %p94 = scmp.ne.s32.totalorder %s89, %s91
      %p95 = scmp.eq.s32.totalorder %s13, 0
      %p96 = por %p94, %p95
      %p97 = scmp.ne.s32.totalorder %s89, %s91
      %p98 = scmp.eq.s32.totalorder %s18, 1
      %p99 = por %p97, %p98
      %p100 = scmp.ne.s32.totalorder %s91, %s92
      %p101 = scmp.eq.s32.totalorder %s18, 0
      %p102 = por %p100, %p101
      %p103 = scmp.ne.s32.totalorder %s91, %s92
      %p104 = scmp.eq.s32.totalorder %s19, 1
      %p105 = por %p103, %p104
      %p107 = scmp.ne.s32.totalorder %s92, %s106
      %p108 = scmp.eq.s32.totalorder %s19, 0
      %p109 = por %p107, %p108
      %s111 = sadd.s32 %s110, 1
      %p114 = scmp.eq.s32.totalorder %s13, 1
      %p115 = scmp.ne.s32.totalorder %s110, %s112
      %p116 = scmp.eq.s32.totalorder %s13, 0
      %p117 = por %p115, %p116
      %p118 = scmp.ne.s32.totalorder %s110, %s112
      %p119 = scmp.eq.s32.totalorder %s18, 1
      %p120 = por %p118, %p119
      %p121 = scmp.ne.s32.totalorder %s112, %s113
      %p122 = scmp.eq.s32.totalorder %s18, 0
      %p123 = por %p121, %p122
      %p124 = scmp.ne.s32.totalorder %s112, %s113
      %p125 = scmp.eq.s32.totalorder %s19, 1
      %p126 = por %p124, %p125
      %p128 = scmp.ne.s32.totalorder %s113, %s127
      %p129 = scmp.eq.s32.totalorder %s19, 0
      %p130 = por %p128, %p129
      %s132 = sadd.s32 %s131, 1
      %p135 = scmp.eq.s32.totalorder %s13, 1
      %p136 = scmp.ne.s32.totalorder %s131, %s133
      %p137 = scmp.eq.s32.totalorder %s13, 0
      %p138 = por %p136, %p137
      %p139 = scmp.ne.s32.totalorder %s131, %s133
      %p140 = scmp.eq.s32.totalorder %s18, 1
      %p141 = por %p139, %p140
      %p142 = scmp.ne.s32.totalorder %s133, %s134
      %p143 = scmp.eq.s32.totalorder %s18, 0
      %p144 = por %p142, %p143
      %p145 = scmp.ne.s32.totalorder %s133, %s134
      %p146 = scmp.eq.s32.totalorder %s19, 1
      %p147 = por %p145, %p146
      %p149 = scmp.ne.s32.totalorder %s134, %s148
      %p150 = scmp.eq.s32.totalorder %s19, 0
      %p151 = por %p149, %p150
      %s153 = sadd.s32 %s152, 1
      %p156 = scmp.eq.s32.totalorder %s13, 1
      %p157 = scmp.ne.s32.totalorder %s152, %s154
      %p158 = scmp.eq.s32.totalorder %s13, 0
      %p159 = por %p157, %p158
      %p160 = scmp.ne.s32.totalorder %s152, %s154
      %p161 = scmp.eq.s32.totalorder %s18, 1
      %p162 = por %p160, %p161
      %p163 = scmp.ne.s32.totalorder %s154, %s155
      %p164 = scmp.eq.s32.totalorder %s18, 0
      %p165 = por %p163, %p164
      %p166 = scmp.ne.s32.totalorder %s154, %s155
      %p167 = scmp.eq.s32.totalorder %s19, 1
      %p168 = por %p166, %p167
      %p170 = scmp.ne.s32.totalorder %s155, %s169
      %p171 = scmp.eq.s32.totalorder %s19, 0
      %p172 = por %p170, %p171
      %s173 = ssub.s32 %s13, %s20
      %p174 = scmp.eq.s32.totalorder %s173, 0
      %s176 = sadd.s32 %s175, 1
      %s177 = scalar_select %p174, %s175, %s176
      %p180 = pneg %p174
      %p181 = scmp.eq.s32.totalorder %s13, 1
      %p182 = por %p180, %p181
      %p183 = scmp.ne.s32.totalorder %s175, %s178
      %p184 = scmp.eq.s32.totalorder %s13, 0
      %p185 = por %p183, %p184
      %p186 = scmp.ne.s32.totalorder %s175, %s178
      %p187 = scmp.eq.s32.totalorder %s18, 1
      %p188 = por %p186, %p187
      %p189 = scmp.ne.s32.totalorder %s178, %s179
      %p190 = scmp.eq.s32.totalorder %s18, 0
      %p191 = por %p189, %p190
      %p192 = scmp.ne.s32.totalorder %s178, %s179
      %p193 = scmp.eq.s32.totalorder %s19, 1
      %p194 = por %p192, %p193
      %p196 = scmp.ne.s32.totalorder %s179, %s195
      %p197 = scmp.eq.s32.totalorder %s19, 0
      %p198 = por %p196, %p197
      %p199 = scmp.le.s32.totalorder 1, %s13
      %p200 = scmp.lt.s32.totalorder %s13, 3
      %p201 = pnand %p199, %p200
      %p202 = pneg %p201
      // Predicated region
      $region9: #{tpu_custom_call.1} parent=5 // pred_check
        _
      $region10: #{tpu_custom_call.1} parent=5 // pred_check_branch
        %204 = sbr.rel (%p201) target = $region12
      $region11: #{tpu_custom_call.1} parent=5 // pred_region
        %s205 = ssub.s32 %s13, 1
        // Predicated region
        $region13: #{tpu_custom_call.1} parent=11 // pred_check
          %p206 = pneg %p60
        $region14: #{tpu_custom_call.1} parent=11 // pred_check_branch
          %208 = sbr.rel (%p206) target = $region16
        $region15: #{tpu_custom_call.1} parent=11 // pred_region
          _
        $region16: #{tpu_custom_call.1} parent=11 // pred_fallthru
          _
        // Predicated region
        $region17: #{tpu_custom_call.1} parent=11 // pred_check
          %p209 = pneg %p81
        $region18: #{tpu_custom_call.1} parent=11 // pred_check_branch
          %211 = sbr.rel (%p209) target = $region20
        $region19: #{tpu_custom_call.1} parent=11 // pred_region
          _
        $region20: #{tpu_custom_call.1} parent=11 // pred_fallthru
          _
        // Predicated region
        $region21: #{tpu_custom_call.1} parent=11 // pred_check
          %p212 = pneg %p102
        $region22: #{tpu_custom_call.1} parent=11 // pred_check_branch
          %214 = sbr.rel (%p212) target = $region24
        $region23: #{tpu_custom_call.1} parent=11 // pred_region
          _
        $region24: #{tpu_custom_call.1} parent=11 // pred_fallthru
          _
        // Predicated region
        $region25: #{tpu_custom_call.1} parent=11 // pred_check
          %p215 = pneg %p123
        $region26: #{tpu_custom_call.1} parent=11 // pred_check_branch
          %217 = sbr.rel (%p215) target = $region28
        $region27: #{tpu_custom_call.1} parent=11 // pred_region
          _
        $region28: #{tpu_custom_call.1} parent=11 // pred_fallthru
          _
        // Predicated region
        $region29: #{tpu_custom_call.1} parent=11 // pred_check
          %p218 = pneg %p144
        $region30: #{tpu_custom_call.1} parent=11 // pred_check_branch
          %220 = sbr.rel (%p218) target = $region32
        $region31: #{tpu_custom_call.1} parent=11 // pred_region
          _
        $region32: #{tpu_custom_call.1} parent=11 // pred_fallthru
          _
        // Predicated region
        $region33: #{tpu_custom_call.1} parent=11 // pred_check
          %p221 = pneg %p165
        $region34: #{tpu_custom_call.1} parent=11 // pred_check_branch
          %223 = sbr.rel (%p221) target = $region36
        $region35: #{tpu_custom_call.1} parent=11 // pred_region
          _
        $region36: #{tpu_custom_call.1} parent=11 // pred_fallthru
          _
      $region12: #{tpu_custom_call.1} parent=5 // pred_fallthru
        _
      %p224 = scmp.lt.s32.totalorder %s13, 2
      // Predicated region
      $region37: #{tpu_custom_call.1} parent=5 // pred_check
        %p225 = pneg %p224
      $region38: #{tpu_custom_call.1} parent=5 // pred_check_branch
        %227 = sbr.rel (%p225) target = $region40
      $region39: #{tpu_custom_call.1} parent=5 // pred_region
        // Predicated region
        $region41: #{tpu_custom_call.1} parent=39 // pred_check
          %p228 = pneg %p33
        $region42: #{tpu_custom_call.1} parent=39 // pred_check_branch
          %230 = sbr.rel (%p228) target = $region44
        $region43: #{tpu_custom_call.1} parent=39 // pred_region
          %s231 = smul.u32 14, %s13
          %s232 = ssub.s32 25, %s231
          %p233 = scmp.lt.s32.totalorder %s232, 14
          %s234 = scalar_select %p233, %s232, 14
          %s235 = smul.u32 128, %s234
          %p236 = scmp.lt.s32.totalorder %s231, 24
          %s237 = scalar_select %p236, %s231, 24
          %s238 = smul.addr %s237, 8
          %s239 = scalar_lea.vmem %s0, %s238
          %s240 = smul.u32 14, %s13
          %s241 = ssub.s32 25, %s240
          %p242 = scmp.lt.s32.totalorder %s241, 14
          %s243 = scalar_select %p242, %s241, 14
          %s244 = smul.u32 128, %s243
        $region44: #{tpu_custom_call.1} parent=39 // pred_fallthru
          _
      $region40: #{tpu_custom_call.1} parent=5 // pred_fallthru
        _
      %p245 = scmp.le.s32.totalorder 1, %s13
      %p246 = scmp.lt.s32.totalorder %s13, 3
      %p247 = pnand %p245, %p246
      %p248 = pneg %p247
      // Predicated region
      $region45: #{tpu_custom_call.1} parent=5 // pred_check
        _
      $region46: #{tpu_custom_call.1} parent=5 // pred_check_branch
        %250 = sbr.rel (%p247) target = $region48
      $region47: #{tpu_custom_call.1} parent=5 // pred_region
        %s251 = ssub.s32 %s13, 1
        %s252 = smul.u32 14, %s18
        %s253 = ssub.s32 25, %s252
        %p254 = scmp.lt.s32.totalorder %s253, 14
        %s255 = scalar_select %p254, %s253, 14
        %s256 = smul.u32 128, %s255
        %p257 = scmp.lt.s32.totalorder %s252, 24
        %s258 = scalar_select %p257, %s252, 24
        %s259 = smul.addr %s258, 8
        %s260 = scalar_lea.vmem %s0, %s259
        %p261 = pneg %p39
        %p262 = pneg %p36
        %p263 = pneg %p60
        %p264 = pneg %p57
        %p265 = pneg %p81
        %p266 = pneg %p78
        %p267 = pneg %p102
        %p268 = pneg %p99
        %p269 = pneg %p123
        %p270 = pneg %p120
        %p271 = pneg %p144
        %p272 = pneg %p141
        %p273 = pneg %p165
        %p274 = pneg %p162
        %p275 = pneg %p191
        %p276 = pneg %p188
        %s277 = sand.u32 %s178, 1
        %s278 = sand.u32 %s178, 1
        %s279 = smul.addr %s278, 112
        %s280 = scalar_lea.vmem [#allocation2], %s279
        %s281 = smul.u32 14, %s18
        %s282 = ssub.s32 25, %s281
        %p283 = scmp.lt.s32.totalorder %s282, 14
        %s284 = scalar_select %p283, %s282, 14
        %s285 = smul.u32 128, %s284
        %p286 = scmp.lt.s32.totalorder %s281, 24
        %s287 = scalar_select %p286, %s281, 24
        %s288 = smul.addr %s287, 8
        %s289 = scalar_lea.vmem %s0, %s288
        %s290 = smul.u32 14, %s18
        %s291 = ssub.s32 25, %s290
        %p292 = scmp.lt.s32.totalorder %s291, 14
        %s293 = scalar_select %p292, %s291, 14
        %s294 = smul.u32 128, %s293
        %s295 = smul.u32 14, %s18
        %s296 = ssub.s32 25, %s295
        %p297 = scmp.lt.s32.totalorder %s296, 14
        %s298 = scalar_select %p297, %s296, 14
        %s299 = smul.u32 128, %s298
        %v301 = vld [vmem:[%s289] sm:$0xff]
        %v302 = vld [vmem:[%s289 + $0x8] sm:$0xff]
        %v303 = vld [vmem:[%s289 + $0x10] sm:$0xff]
        %v304 = vld [vmem:[%s289 + $0x18] sm:$0xff]
        %v305 = vld [vmem:[%s289 + $0x20] sm:$0xff]
        %v306 = vld [vmem:[%s289 + $0x28] sm:$0xff]
        %v307 = vld [vmem:[%s289 + $0x30] sm:$0xff]
        %v308 = vld [vmem:[%s289 + $0x38] sm:$0xff]
        %v309 = vld [vmem:[%s289 + $0x40] sm:$0xff]
        %v310 = vld [vmem:[%s289 + $0x48] sm:$0xff]
        %v311 = vld [vmem:[%s289 + $0x50] sm:$0xff]
        %v312 = vld [vmem:[%s289 + $0x58] sm:$0xff]
        %v313 = vld [vmem:[%s289 + $0x60] sm:$0xff]
        %v314 = vld [vmem:[%s289 + $0x68] sm:$0xff]
        %v315 = vpack.c.bf16 %v302, %v301
        %v316 = vpack.c.bf16 %v304, %v303
        %v317 = vpack.c.bf16 %v306, %v305
        %v318 = vpack.c.bf16 %v308, %v307
        %v319 = vpack.c.bf16 %v310, %v309
        %v320 = vpack.c.bf16 %v312, %v311
        %v321 = vpack.c.bf16 %v314, %v313
        %v322 = vld [vmem:[%s1] sm:$0xf]
        %v323 = vld [vmem:[%s1 + $0x4] sm:$0xf]
        %v324 = vld [vmem:[%s2] sm:$0x1]
        %v326 = vlaneseq
        %v327 = vshrl.u32 %v326, 7
        %v328 = vsub.s32 0, %v327
        %v329 = vrot.slane %v324, %v328
        %v333 = vunpack.c.l.b16 %v322
        %v334 = vunpack.c.l.b16 %v323
        %v335 = vpack.c.b16 %v334, %v333
        %vm337 = vcmask 130048
        %v339 = vsel %vm337, %v315, 0
        %v342 = vsel %vm337, %v316, 0
        %v345 = vsel %vm337, %v317, 0
        %v348 = vsel %vm337, %v318, 0
        %v351 = vsel %vm337, %v319, 0
        %v354 = vsel %vm337, %v320, 0
        %v357 = vsel %vm337, %v321, 0
        %359 = vmatprep.subr.bf16.mxu0 0
        %360 = vmatpush1.bf16.msra.mxu0 %v335
        %361 = vmatprep.subr.bf16.mxu0 0
        %362 = vmatpush1.bf16.msra.mxu0 0
        %363 = vmatprep.subr.bf16.mxu0 0
        %364 = vmatpush1.bf16.msra.mxu0 0
        %365 = vmatprep.subr.bf16.mxu0 0
        %366 = vmatpush1.bf16.msra.mxu0 0
        %367 = vmatprep.subr.bf16.mxu0 0
        %368 = vmatpush1.bf16.msra.mxu0 0
        %369 = vmatprep.subr.bf16.mxu0 0
        %370 = vmatpush1.bf16.msra.mxu0 0
        %371 = vmatprep.subr.bf16.mxu0 0
        %372 = vmatpush1.bf16.msra.mxu0 0
        %373 = vmatprep.subr.bf16.mxu0 0
        %374 = vmatpush1.bf16.msra.mxu0 0
        %375 = vmatprep.subr.bf16.mxu0 0
        %376 = vmatpush1.bf16.msra.mxu0 0
        %377 = vmatprep.subr.bf16.mxu0 0
        %378 = vmatpush1.bf16.msra.mxu0 0
        %379 = vmatprep.subr.bf16.mxu0 0
        %380 = vmatpush1.bf16.msra.mxu0 0
        %381 = vmatprep.subr.bf16.mxu0 0
        %382 = vmatpush1.bf16.msra.mxu0 0
        %383 = vmatprep.subr.bf16.mxu0 0
        %384 = vmatpush1.bf16.msra.mxu0 0
        %385 = vmatprep.subr.bf16.mxu0 0
        %386 = vmatpush1.bf16.msra.mxu0 0
        %387 = vmatprep.subr.bf16.mxu0 0
        %388 = vmatpush1.bf16.msra.mxu0 0
        %389 = vmatprep.subr.bf16.mxu0 0
        %390 = vmatpush1.bf16.msra.mxu0 0
        %391 = vmatprep.mubr.bf16.mxu0 0
        %392 = vmatmul.mubr.bf16.gmra.mrb[0].mxu0 %v339
        %v393 = vpop.f32.mrb[0].mxu0
        %v394 = vadd.f32 %v329, %v393
        %v395 = vpop.f32.mrb[0].mxu0
        %v396 = vpop.f32.mrb[0].mxu0
        %v397 = vadd.f32 %v329, %v396
        %v398 = vpop.f32.mrb[0].mxu0
        %399 = vmatprep.mubr.bf16.mxu0 0
        %400 = vmatmul.mubr.bf16.gmra.mrb[0].mxu0 %v342
        %v401 = vpop.f32.mrb[0].mxu0
        %v402 = vadd.f32 %v329, %v401
        %v403 = vpop.f32.mrb[0].mxu0
        %v404 = vpop.f32.mrb[0].mxu0
        %v405 = vadd.f32 %v329, %v404
        %v406 = vpop.f32.mrb[0].mxu0
        %407 = vmatprep.mubr.bf16.mxu0 0
        %408 = vmatmul.mubr.bf16.gmra.mrb[0].mxu0 %v345
        %v409 = vpop.f32.mrb[0].mxu0
        %v410 = vadd.f32 %v329, %v409
        %v411 = vpop.f32.mrb[0].mxu0
        %v412 = vpop.f32.mrb[0].mxu0
        %v413 = vadd.f32 %v329, %v412
        %v414 = vpop.f32.mrb[0].mxu0
        %415 = vmatprep.mubr.bf16.mxu0 0
        %416 = vmatmul.mubr.bf16.gmra.mrb[0].mxu0 %v348
        %v417 = vpop.f32.mrb[0].mxu0
        %v418 = vadd.f32 %v329, %v417
        %v419 = vpop.f32.mrb[0].mxu0
        %v420 = vpop.f32.mrb[0].mxu0
        %v421 = vadd.f32 %v329, %v420
        %v422 = vpop.f32.mrb[0].mxu0
        %423 = vmatprep.mubr.bf16.mxu0 0
        %424 = vmatmul.mubr.bf16.gmra.mrb[0].mxu0 %v351
        %v425 = vpop.f32.mrb[0].mxu0
        %v426 = vadd.f32 %v329, %v425
        %v427 = vpop.f32.mrb[0].mxu0
        %v428 = vpop.f32.mrb[0].mxu0
        %v429 = vadd.f32 %v329, %v428
        %v430 = vpop.f32.mrb[0].mxu0
        %431 = vmatprep.mubr.bf16.mxu0 0
        %432 = vmatmul.mubr.bf16.gmra.mrb[0].mxu0 %v354
        %v433 = vpop.f32.mrb[0].mxu0
        %v434 = vadd.f32 %v329, %v433
        %v435 = vpop.f32.mrb[0].mxu0
        %v436 = vpop.f32.mrb[0].mxu0
        %v437 = vadd.f32 %v329, %v436
        %v438 = vpop.f32.mrb[0].mxu0
        %439 = vmatprep.mubr.bf16.mxu0 0
        %440 = vmatmul.mubr.bf16.gmra.mrb[0].mxu0 %v357
        %v441 = vpop.f32.mrb[0].mxu0
        %v442 = vadd.f32 %v329, %v441
        %v443 = vpop.f32.mrb[0].mxu0
        %v444 = vpop.f32.mrb[0].mxu0
        %v445 = vadd.f32 %v329, %v444
        %v446 = vpop.f32.mrb[0].mxu0
        %447 = vdwg.mxu0
        %v448 = vmax.f32 %v394, 0.0
        %v449 = vmax.f32 %v397, 0.0
        %v450 = vmax.f32 %v402, 0.0
        %v451 = vmax.f32 %v405, 0.0
        %v452 = vmax.f32 %v410, 0.0
        %v453 = vmax.f32 %v413, 0.0
        %v454 = vmax.f32 %v418, 0.0
        %v455 = vmax.f32 %v421, 0.0
        %v456 = vmax.f32 %v426, 0.0
        %v457 = vmax.f32 %v429, 0.0
        %v458 = vmax.f32 %v434, 0.0
        %v459 = vmax.f32 %v437, 0.0
        %v460 = vmax.f32 %v442, 0.0
        %v461 = vmax.f32 %v445, 0.0
        %v462 = vpack.c.bf16 %v449, %v448
        %v463 = vpack.c.bf16 %v451, %v450
        %v464 = vpack.c.bf16 %v453, %v452
        %v465 = vpack.c.bf16 %v455, %v454
        %v466 = vpack.c.bf16 %v457, %v456
        %v467 = vpack.c.bf16 %v459, %v458
        %v468 = vpack.c.bf16 %v461, %v460
        %v469 = vld [vmem:[%s3] sm:$0xf]
        %v470 = vld [vmem:[%s3 + $0x4] sm:$0xf]
        %v471 = vld [vmem:[%s3 + $0x8] sm:$0xf]
        %v472 = vld [vmem:[%s3 + $0xc] sm:$0xf]
        %v473 = vld [vmem:[%s4] sm:$0x1]
        %v475 = vlaneseq
        %v476 = vshrl.u32 %v475, 7
        %v477 = vsub.s32 0, %v476
        %v478 = vrot.slane %v473, %v477
        %v484 = vunpack.c.l.b16 %v469
        %v485 = vunpack.c.l.b16 %v470
        %v486 = vunpack.c.l.b16 %v471
        %v487 = vunpack.c.l.b16 %v472
        %v488 = vpack.c.b16 %v485, %v484
        %v489 = vpack.c.b16 %v487, %v486
        %vm492 = vcmask 261120
        %v494 = vsel %vm492, %v462, 0
        %v497 = vsel %vm492, %v463, 0
        %v500 = vsel %vm492, %v464, 0
        %v503 = vsel %vm492, %v465, 0
        %v506 = vsel %vm492, %v466, 0
        %v509 = vsel %vm492, %v467, 0
        %v512 = vsel %vm492, %v468, 0
        %514 = vmatprep.subr.bf16.mxu0 0
        %515 = vmatpush1.bf16.msra.mxu0 %v488
        %516 = vmatprep.subr.bf16.mxu0 0
        %517 = vmatpush1.bf16.msra.mxu0 %v489
        %518 = vmatprep.subr.bf16.mxu0 0
        %519 = vmatpush1.bf16.msra.mxu0 0
        %520 = vmatprep.subr.bf16.mxu0 0
        %521 = vmatpush1.bf16.msra.mxu0 0
        %522 = vmatprep.subr.bf16.mxu0 0
        %523 = vmatpush1.bf16.msra.mxu0 0
        %524 = vmatprep.subr.bf16.mxu0 0
        %525 = vmatpush1.bf16.msra.mxu0 0
        %526 = vmatprep.subr.bf16.mxu0 0
        %527 = vmatpush1.bf16.msra.mxu0 0
        %528 = vmatprep.subr.bf16.mxu0 0
        %529 = vmatpush1.bf16.msra.mxu0 0
        %530 = vmatprep.subr.bf16.mxu0 0
        %531 = vmatpush1.bf16.msra.mxu0 0
        %532 = vmatprep.subr.bf16.mxu0 0
        %533 = vmatpush1.bf16.msra.mxu0 0
        %534 = vmatprep.subr.bf16.mxu0 0
        %535 = vmatpush1.bf16.msra.mxu0 0
        %536 = vmatprep.subr.bf16.mxu0 0
        %537 = vmatpush1.bf16.msra.mxu0 0
        %538 = vmatprep.subr.bf16.mxu0 0
        %539 = vmatpush1.bf16.msra.mxu0 0
        %540 = vmatprep.subr.bf16.mxu0 0
        %541 = vmatpush1.bf16.msra.mxu0 0
        %542 = vmatprep.subr.bf16.mxu0 0
        %543 = vmatpush1.bf16.msra.mxu0 0
        %544 = vmatprep.subr.bf16.mxu0 0
        %545 = vmatpush1.bf16.msra.mxu0 0
        %546 = vmatprep.mubr.bf16.mxu0 0
        %547 = vmatmul.mubr.bf16.gmra.mrb[0].mxu0 %v494
        %v548 = vpop.f32.mrb[0].mxu0
        %v549 = vadd.f32 %v478, %v548
        %v550 = vpop.f32.mrb[0].mxu0
        %v551 = vpop.f32.mrb[0].mxu0
        %v552 = vadd.f32 %v478, %v551
        %v553 = vpop.f32.mrb[0].mxu0
        %554 = vmatprep.mubr.bf16.mxu0 0
        %555 = vmatmul.mubr.bf16.gmra.mrb[0].mxu0 %v497
        %v556 = vpop.f32.mrb[0].mxu0
        %v557 = vadd.f32 %v478, %v556
        %v558 = vpop.f32.mrb[0].mxu0
        %v559 = vpop.f32.mrb[0].mxu0
        %v560 = vadd.f32 %v478, %v559
        %v561 = vpop.f32.mrb[0].mxu0
        %562 = vmatprep.mubr.bf16.mxu0 0
        %563 = vmatmul.mubr.bf16.gmra.mrb[0].mxu0 %v500
        %v564 = vpop.f32.mrb[0].mxu0
        %v565 = vadd.f32 %v478, %v564
        %v566 = vpop.f32.mrb[0].mxu0
        %v567 = vpop.f32.mrb[0].mxu0
        %v568 = vadd.f32 %v478, %v567
        %v569 = vpop.f32.mrb[0].mxu0
        %570 = vmatprep.mubr.bf16.mxu0 0
        %571 = vmatmul.mubr.bf16.gmra.mrb[0].mxu0 %v503
        %v572 = vpop.f32.mrb[0].mxu0
        %v573 = vadd.f32 %v478, %v572
        %v574 = vpop.f32.mrb[0].mxu0
        %v575 = vpop.f32.mrb[0].mxu0
        %v576 = vadd.f32 %v478, %v575
        %v577 = vpop.f32.mrb[0].mxu0
        %578 = vmatprep.mubr.bf16.mxu0 0
        %579 = vmatmul.mubr.bf16.gmra.mrb[0].mxu0 %v506
        %v580 = vpop.f32.mrb[0].mxu0
        %v581 = vadd.f32 %v478, %v580
        %v582 = vpop.f32.mrb[0].mxu0
        %v583 = vpop.f32.mrb[0].mxu0
        %v584 = vadd.f32 %v478, %v583
        %v585 = vpop.f32.mrb[0].mxu0
        %586 = vmatprep.mubr.bf16.mxu0 0
        %587 = vmatmul.mubr.bf16.gmra.mrb[0].mxu0 %v509
        %v588 = vpop.f32.mrb[0].mxu0
        %v589 = vadd.f32 %v478, %v588
        %v590 = vpop.f32.mrb[0].mxu0
        %v591 = vpop.f32.mrb[0].mxu0
        %v592 = vadd.f32 %v478, %v591
        %v593 = vpop.f32.mrb[0].mxu0
        %594 = vmatprep.mubr.bf16.mxu0 0
        %595 = vmatmul.mubr.bf16.gmra.mrb[0].mxu0 %v512
        %v596 = vpop.f32.mrb[0].mxu0
        %v597 = vadd.f32 %v478, %v596
        %v598 = vpop.f32.mrb[0].mxu0
        %v599 = vpop.f32.mrb[0].mxu0
        %v600 = vadd.f32 %v478, %v599
        %v601 = vpop.f32.mrb[0].mxu0
        %602 = vdwg.mxu0
        %v603 = vmax.f32 %v549, 0.0
        %v604 = vmax.f32 %v552, 0.0
        %v605 = vmax.f32 %v557, 0.0
        %v606 = vmax.f32 %v560, 0.0
        %v607 = vmax.f32 %v565, 0.0
        %v608 = vmax.f32 %v568, 0.0
        %v609 = vmax.f32 %v573, 0.0
        %v610 = vmax.f32 %v576, 0.0
        %v611 = vmax.f32 %v581, 0.0
        %v612 = vmax.f32 %v584, 0.0
        %v613 = vmax.f32 %v589, 0.0
        %v614 = vmax.f32 %v592, 0.0
        %v615 = vmax.f32 %v597, 0.0
        %v616 = vmax.f32 %v600, 0.0
        %v617 = vpack.c.bf16 %v604, %v603
        %v618 = vpack.c.bf16 %v606, %v605
        %v619 = vpack.c.bf16 %v608, %v607
        %v620 = vpack.c.bf16 %v610, %v609
        %v621 = vpack.c.bf16 %v612, %v611
        %v622 = vpack.c.bf16 %v614, %v613
        %v623 = vpack.c.bf16 %v616, %v615
        %v624 = vld [vmem:[%s5] sm:$0xf]
        %v625 = vld [vmem:[%s5 + $0x4] sm:$0xf]
        %v626 = vld [vmem:[%s5 + $0x8] sm:$0xf]
        %v627 = vld [vmem:[%s5 + $0xc] sm:$0xf]
        %v628 = vld [vmem:[%s6] sm:$0x1]
        %v630 = vlaneseq
        %v631 = vshrl.u32 %v630, 7
        %v632 = vsub.s32 0, %v631
        %v633 = vrot.slane %v628, %v632
        %v639 = vunpack.c.l.b16 %v624
        %v640 = vunpack.c.l.b16 %v625
        %v641 = vunpack.c.l.b16 %v626
        %v642 = vunpack.c.l.b16 %v627
        %v643 = vpack.c.b16 %v640, %v639
        %v644 = vpack.c.b16 %v642, %v641
        %v648 = vsel %vm492, %v617, 0
        %v651 = vsel %vm492, %v618, 0
        %v654 = vsel %vm492, %v619, 0
        %v657 = vsel %vm492, %v620, 0
        %v660 = vsel %vm492, %v621, 0
        %v663 = vsel %vm492, %v622, 0
        %v666 = vsel %vm492, %v623, 0
        %668 = vmatprep.subr.bf16.mxu0 0
        %669 = vmatpush1.bf16.msra.mxu0 %v643
        %670 = vmatprep.subr.bf16.mxu0 0
        %671 = vmatpush1.bf16.msra.mxu0 %v644
        %672 = vmatprep.subr.bf16.mxu0 0
        %673 = vmatpush1.bf16.msra.mxu0 0
        %674 = vmatprep.subr.bf16.mxu0 0
        %675 = vmatpush1.bf16.msra.mxu0 0
        %676 = vmatprep.subr.bf16.mxu0 0
        %677 = vmatpush1.bf16.msra.mxu0 0
        %678 = vmatprep.subr.bf16.mxu0 0
        %679 = vmatpush1.bf16.msra.mxu0 0
        %680 = vmatprep.subr.bf16.mxu0 0
        %681 = vmatpush1.bf16.msra.mxu0 0
        %682 = vmatprep.subr.bf16.mxu0 0
        %683 = vmatpush1.bf16.msra.mxu0 0
        %684 = vmatprep.subr.bf16.mxu0 0
        %685 = vmatpush1.bf16.msra.mxu0 0
        %686 = vmatprep.subr.bf16.mxu0 0
        %687 = vmatpush1.bf16.msra.mxu0 0
        %688 = vmatprep.subr.bf16.mxu0 0
        %689 = vmatpush1.bf16.msra.mxu0 0
        %690 = vmatprep.subr.bf16.mxu0 0
        %691 = vmatpush1.bf16.msra.mxu0 0
        %692 = vmatprep.subr.bf16.mxu0 0
        %693 = vmatpush1.bf16.msra.mxu0 0
        %694 = vmatprep.subr.bf16.mxu0 0
        %695 = vmatpush1.bf16.msra.mxu0 0
        %696 = vmatprep.subr.bf16.mxu0 0
        %697 = vmatpush1.bf16.msra.mxu0 0
        %698 = vmatprep.subr.bf16.mxu0 0
        %699 = vmatpush1.bf16.msra.mxu0 0
        %700 = vmatprep.mubr.bf16.mxu0 0
        %701 = vmatmul.mubr.bf16.gmra.mrb[0].mxu0 %v648
        %v702 = vpop.f32.mrb[0].mxu0
        %v703 = vadd.f32 %v633, %v702
        %v704 = vpop.f32.mrb[0].mxu0
        %v705 = vpop.f32.mrb[0].mxu0
        %v706 = vadd.f32 %v633, %v705
        %v707 = vpop.f32.mrb[0].mxu0
        %708 = vmatprep.mubr.bf16.mxu0 0
        %709 = vmatmul.mubr.bf16.gmra.mrb[0].mxu0 %v651
        %v710 = vpop.f32.mrb[0].mxu0
        %v711 = vadd.f32 %v633, %v710
        %v712 = vpop.f32.mrb[0].mxu0
        %v713 = vpop.f32.mrb[0].mxu0
        %v714 = vadd.f32 %v633, %v713
        %v715 = vpop.f32.mrb[0].mxu0
        %716 = vmatprep.mubr.bf16.mxu0 0
        %717 = vmatmul.mubr.bf16.gmra.mrb[0].mxu0 %v654
        %v718 = vpop.f32.mrb[0].mxu0
        %v719 = vadd.f32 %v633, %v718
        %v720 = vpop.f32.mrb[0].mxu0
        %v721 = vpop.f32.mrb[0].mxu0
        %v722 = vadd.f32 %v633, %v721
        %v723 = vpop.f32.mrb[0].mxu0
        %724 = vmatprep.mubr.bf16.mxu0 0
        %725 = vmatmul.mubr.bf16.gmra.mrb[0].mxu0 %v657
        %v726 = vpop.f32.mrb[0].mxu0
        %v727 = vadd.f32 %v633, %v726
        %v728 = vpop.f32.mrb[0].mxu0
        %v729 = vpop.f32.mrb[0].mxu0
        %v730 = vadd.f32 %v633, %v729
        %v731 = vpop.f32.mrb[0].mxu0
        %732 = vmatprep.mubr.bf16.mxu0 0
        %733 = vmatmul.mubr.bf16.gmra.mrb[0].mxu0 %v660
        %v734 = vpop.f32.mrb[0].mxu0
        %v735 = vadd.f32 %v633, %v734
        %v736 = vpop.f32.mrb[0].mxu0
        %v737 = vpop.f32.mrb[0].mxu0
        %v738 = vadd.f32 %v633, %v737
        %v739 = vpop.f32.mrb[0].mxu0
        %740 = vmatprep.mubr.bf16.mxu0 0
        %741 = vmatmul.mubr.bf16.gmra.mrb[0].mxu0 %v663
        %v742 = vpop.f32.mrb[0].mxu0
        %v743 = vadd.f32 %v633, %v742
        %v744 = vpop.f32.mrb[0].mxu0
        %v745 = vpop.f32.mrb[0].mxu0
        %v746 = vadd.f32 %v633, %v745
        %v747 = vpop.f32.mrb[0].mxu0
        %748 = vmatprep.mubr.bf16.mxu0 0
        %749 = vmatmul.mubr.bf16.gmra.mrb[0].mxu0 %v666
        %v750 = vpop.f32.mrb[0].mxu0
        %v751 = vadd.f32 %v633, %v750
        %v752 = vpop.f32.mrb[0].mxu0
        %v753 = vpop.f32.mrb[0].mxu0
        %v754 = vadd.f32 %v633, %v753
        %v755 = vpop.f32.mrb[0].mxu0
        %756 = vdwg.mxu0
        %vm757 = vcmask 23552
        %758 = vst.msk [vmem:[%s280] sm:$0xff] %vm757, %v703
        %759 = vst.msk [vmem:[%s280 + $0x8] sm:$0xff] %vm757, %v706
        %760 = vst.msk [vmem:[%s280 + $0x10] sm:$0xff] %vm757, %v711
        %761 = vst.msk [vmem:[%s280 + $0x18] sm:$0xff] %vm757, %v714
        %762 = vst.msk [vmem:[%s280 + $0x20] sm:$0xff] %vm757, %v719
        %763 = vst.msk [vmem:[%s280 + $0x28] sm:$0xff] %vm757, %v722
        %764 = vst.msk [vmem:[%s280 + $0x30] sm:$0xff] %vm757, %v727
        %765 = vst.msk [vmem:[%s280 + $0x38] sm:$0xff] %vm757, %v730
        %766 = vst.msk [vmem:[%s280 + $0x40] sm:$0xff] %vm757, %v735
        %767 = vst.msk [vmem:[%s280 + $0x48] sm:$0xff] %vm757, %v738
        %768 = vst.msk [vmem:[%s280 + $0x50] sm:$0xff] %vm757, %v743
        %769 = vst.msk [vmem:[%s280 + $0x58] sm:$0xff] %vm757, %v746
        %770 = vst.msk [vmem:[%s280 + $0x60] sm:$0xff] %vm757, %v751
        %771 = vst.msk [vmem:[%s280 + $0x68] sm:$0xff] %vm757, %v754
        %s772 = sand.u32 %s178, 1
        %s773 = sand.u32 %s178, 1
        %s774 = smul.addr %s773, 112
        %s775 = scalar_lea.vmem [#allocation2], %s774
        // Predicated region
        $region49: #{tpu_custom_call.1} parent=47 // pred_check
          %p776 = pneg %p188
        $region50: #{tpu_custom_call.1} parent=47 // pred_check_branch
          %778 = sbr.rel (%p776) target = $region52
        $region51: #{tpu_custom_call.1} parent=47 // pred_region
          %s779 = smul.u32 14, %s18
          %s780 = ssub.s32 25, %s779
          %p781 = scmp.lt.s32.totalorder %s780, 14
          %s782 = scalar_select %p781, %s780, 14
          %s783 = smul.u32 128, %s782
          %p784 = scmp.ne.s32.totalorder 0, %s783
          %s785 = smul.addr %s779, 8
          %s786 = scalar_lea.vmem %s7, %s785
          // Predicated region
          $region53: #{tpu_custom_call.1} parent=51 // pred_check
            %p787 = pneg %p784
          $region54: #{tpu_custom_call.1} parent=51 // pred_check_branch
            %789 = sbr.rel (%p787) target = $region56
          $region55: #{tpu_custom_call.1} parent=51 // pred_region
            // Predicated region
            $region57: #{tpu_custom_call.1} parent=55 // pred_check
              _
            $region58: #{tpu_custom_call.1} parent=55 // pred_check_branch
              %791 = sbr.rel (0) target = $region60
            $region59: #{tpu_custom_call.1} parent=55 // pred_region
              // Predicated region
              $region79: #{tpu_custom_call.1} parent=59 // pred_check
                _
              $region80: #{tpu_custom_call.1} parent=59 // pred_check_branch
                %867 = sbr.rel (0) target = $region82
              $region81: #{tpu_custom_call.1} parent=59 // pred_region
                %s868 = sdiv.u32.pop %s782, 14
                %s869 = srem.u32.pop %s782, 14
                // While loop
                $region83: #{tpu_custom_call.1} parent=81 // loop_pre_header
                  _
                $region84: #{tpu_custom_call.1} parent=81 // loop_header
                  %s871 = sphi 0, %s873
                  %p872 = scmp.ge.s32.totalorder %s871, %s868
                  %s876 = sphi 0, %s909
                  %s877 = sphi %s775, %s912
                  %s878 = sphi %s786, %s913
                $region85: #{tpu_custom_call.1} parent=81 // loop_header_branch
                  %875 = sbr.rel (%p872) target = $region89
                $region86: #{tpu_custom_call.1} parent=81 // loop_body
                  %v879 = vld [vmem:[%s877] sm:$0xff]
                  %880 = vst [vmem:[%s878] sm:$0xff] %v879
                  %v881 = vld [vmem:[%s877 + $0x8] sm:$0xff]
                  %882 = vst [vmem:[%s878 + $0x8] sm:$0xff] %v881
                  %v883 = vld [vmem:[%s877 + $0x10] sm:$0xff]
                  %884 = vst [vmem:[%s878 + $0x10] sm:$0xff] %v883
                  %v885 = vld [vmem:[%s877 + $0x18] sm:$0xff]
                  %886 = vst [vmem:[%s878 + $0x18] sm:$0xff] %v885
                  %v887 = vld [vmem:[%s877 + $0x20] sm:$0xff]
                  %888 = vst [vmem:[%s878 + $0x20] sm:$0xff] %v887
                  %v889 = vld [vmem:[%s877 + $0x28] sm:$0xff]
                  %890 = vst [vmem:[%s878 + $0x28] sm:$0xff] %v889
                  %v891 = vld [vmem:[%s877 + $0x30] sm:$0xff]
                  %892 = vst [vmem:[%s878 + $0x30] sm:$0xff] %v891
                  %v893 = vld [vmem:[%s877 + $0x38] sm:$0xff]
                  %894 = vst [vmem:[%s878 + $0x38] sm:$0xff] %v893
                  %v895 = vld [vmem:[%s877 + $0x40] sm:$0xff]
                  %896 = vst [vmem:[%s878 + $0x40] sm:$0xff] %v895
                  %v897 = vld [vmem:[%s877 + $0x48] sm:$0xff]
                  %898 = vst [vmem:[%s878 + $0x48] sm:$0xff] %v897
                  %v899 = vld [vmem:[%s877 + $0x50] sm:$0xff]
                  %900 = vst [vmem:[%s878 + $0x50] sm:$0xff] %v899
                  %v901 = vld [vmem:[%s877 + $0x58] sm:$0xff]
                  %902 = vst [vmem:[%s878 + $0x58] sm:$0xff] %v901
                  %v903 = vld [vmem:[%s877 + $0x60] sm:$0xff]
                  %904 = vst [vmem:[%s878 + $0x60] sm:$0xff] %v903
                  %v905 = vld [vmem:[%s877 + $0x68] sm:$0xff]
                  %906 = vst [vmem:[%s878 + $0x68] sm:$0xff] %v905
                  %s907 = sadd.s32 1, %s876
                  %p908 = scmp.ge.s32.totalorder %s907, %s868
                  %s909 = scalar_select %p908, 0, %s907
                  %s910 = smul.u32 %s909, 112
                  %s911 = smul.u32 %s909, 112
                  %s912 = scalar_lea.vmem %s775, %s910 [#allocation2]
                  %s913 = scalar_lea.vmem %s786, %s911
                $region87: #{tpu_custom_call.1} parent=81 // loop_footer
                  %s873 = sadd.s32 %s871, 1
                $region88: #{tpu_custom_call.1} parent=81 // loop_footer_branch
                  %870 = sbr.rel target = $region84
                $region89: #{tpu_custom_call.1} parent=81 // loop_exit
                  _
                %s914 = sdiv.u32.pop %s782, 14
                %s915 = srem.u32.pop %s782, 14
                %s916 = smul.u32 %s914, 14
                %s917 = smul.u32 8, %s916
                %s918 = scalar_lea.vmem %s775, %s917 [#allocation2]
                %s919 = smul.u32 8, %s916
                %s920 = scalar_lea.vmem %s786, %s919
                // While loop
                $region90: #{tpu_custom_call.1} parent=81 // loop_pre_header
                  _
                $region91: #{tpu_custom_call.1} parent=81 // loop_header
                  %s922 = sphi 0, %s924
                  %p923 = scmp.ge.s32.totalorder %s922, %s915
                  %s927 = sphi 0, %s934
                  %s928 = sphi %s918, %s937
                  %s929 = sphi %s920, %s938
                $region92: #{tpu_custom_call.1} parent=81 // loop_header_branch
                  %926 = sbr.rel (%p923) target = $region96
                $region93: #{tpu_custom_call.1} parent=81 // loop_body
                  %v930 = vld [vmem:[%s928] sm:$0xff]
                  %931 = vst [vmem:[%s929] sm:$0xff] %v930
                  %s932 = sadd.s32 1, %s927
                  %p933 = scmp.ge.s32.totalorder %s932, %s915
                  %s934 = scalar_select %p933, 0, %s932
                  %s935 = smul.u32 %s934, 8
                  %s936 = smul.u32 %s934, 8
                  %s937 = scalar_lea.vmem %s918, %s935 [#allocation2]
                  %s938 = scalar_lea.vmem %s920, %s936
                $region94: #{tpu_custom_call.1} parent=81 // loop_footer
                  %s924 = sadd.s32 %s922, 1
                $region95: #{tpu_custom_call.1} parent=81 // loop_footer_branch
                  %921 = sbr.rel target = $region91
                $region96: #{tpu_custom_call.1} parent=81 // loop_exit
                  _
              $region82: #{tpu_custom_call.1} parent=59 // pred_fallthru
                _
              // Predicated region
              $region97: #{tpu_custom_call.1} parent=59 // pred_check
                _
              $region98: #{tpu_custom_call.1} parent=59 // pred_check_branch
                %940 = sbr.rel target = $region100
              $region99: #{tpu_custom_call.1} parent=59 // pred_region
                _
              $region100: #{tpu_custom_call.1} parent=59 // pred_fallthru
                _
            $region60: #{tpu_custom_call.1} parent=55 // pred_fallthru
              _
            // Predicated region
            $region61: #{tpu_custom_call.1} parent=55 // pred_check
              _
            $region62: #{tpu_custom_call.1} parent=55 // pred_check_branch
              %793 = sbr.rel target = $region64
            $region63: #{tpu_custom_call.1} parent=55 // pred_region
              %s795 = sdiv.u32.pop %s782, 14
              %s796 = srem.u32.pop %s782, 14
              // While loop
              $region65: #{tpu_custom_call.1} parent=63 // loop_pre_header
                _
              $region66: #{tpu_custom_call.1} parent=63 // loop_header
                %s798 = sphi 0, %s800
                %p799 = scmp.ge.s32.totalorder %s798, %s795
                %s803 = sphi 0, %s836
                %s804 = sphi %s775, %s839
                %s805 = sphi %s786, %s840
              $region67: #{tpu_custom_call.1} parent=63 // loop_header_branch
                %802 = sbr.rel (%p799) target = $region71
              $region68: #{tpu_custom_call.1} parent=63 // loop_body
                %v806 = vld [vmem:[%s804] sm:$0xff]
                %807 = vst [vmem:[%s805] sm:$0xff] %v806
                %v808 = vld [vmem:[%s804 + $0x8] sm:$0xff]
                %809 = vst [vmem:[%s805 + $0x8] sm:$0xff] %v808
                %v810 = vld [vmem:[%s804 + $0x10] sm:$0xff]
                %811 = vst [vmem:[%s805 + $0x10] sm:$0xff] %v810
                %v812 = vld [vmem:[%s804 + $0x18] sm:$0xff]
                %813 = vst [vmem:[%s805 + $0x18] sm:$0xff] %v812
                %v814 = vld [vmem:[%s804 + $0x20] sm:$0xff]
                %815 = vst [vmem:[%s805 + $0x20] sm:$0xff] %v814
                %v816 = vld [vmem:[%s804 + $0x28] sm:$0xff]
                %817 = vst [vmem:[%s805 + $0x28] sm:$0xff] %v816
                %v818 = vld [vmem:[%s804 + $0x30] sm:$0xff]
                %819 = vst [vmem:[%s805 + $0x30] sm:$0xff] %v818
                %v820 = vld [vmem:[%s804 + $0x38] sm:$0xff]
                %821 = vst [vmem:[%s805 + $0x38] sm:$0xff] %v820
                %v822 = vld [vmem:[%s804 + $0x40] sm:$0xff]
                %823 = vst [vmem:[%s805 + $0x40] sm:$0xff] %v822
                %v824 = vld [vmem:[%s804 + $0x48] sm:$0xff]
                %825 = vst [vmem:[%s805 + $0x48] sm:$0xff] %v824
                %v826 = vld [vmem:[%s804 + $0x50] sm:$0xff]
                %827 = vst [vmem:[%s805 + $0x50] sm:$0xff] %v826
                %v828 = vld [vmem:[%s804 + $0x58] sm:$0xff]
                %829 = vst [vmem:[%s805 + $0x58] sm:$0xff] %v828
                %v830 = vld [vmem:[%s804 + $0x60] sm:$0xff]
                %831 = vst [vmem:[%s805 + $0x60] sm:$0xff] %v830
                %v832 = vld [vmem:[%s804 + $0x68] sm:$0xff]
                %833 = vst [vmem:[%s805 + $0x68] sm:$0xff] %v832
                %s834 = sadd.s32 1, %s803
                %p835 = scmp.ge.s32.totalorder %s834, %s795
                %s836 = scalar_select %p835, 0, %s834
                %s837 = smul.u32 %s836, 112
                %s838 = smul.u32 %s836, 112
                %s839 = scalar_lea.vmem %s775, %s837 [#allocation2]
                %s840 = scalar_lea.vmem %s786, %s838
              $region69: #{tpu_custom_call.1} parent=63 // loop_footer
                %s800 = sadd.s32 %s798, 1
              $region70: #{tpu_custom_call.1} parent=63 // loop_footer_branch
                %797 = sbr.rel target = $region66
              $region71: #{tpu_custom_call.1} parent=63 // loop_exit
                _
              %s841 = sdiv.u32.pop %s782, 14
              %s842 = srem.u32.pop %s782, 14
              %s843 = smul.u32 %s841, 14
              %s844 = smul.u32 8, %s843
              %s845 = scalar_lea.vmem %s775, %s844 [#allocation2]
              %s846 = smul.u32 8, %s843
              %s847 = scalar_lea.vmem %s786, %s846
              // While loop
              $region72: #{tpu_custom_call.1} parent=63 // loop_pre_header
                _
              $region73: #{tpu_custom_call.1} parent=63 // loop_header
                %s849 = sphi 0, %s851
                %p850 = scmp.ge.s32.totalorder %s849, %s842
                %s854 = sphi 0, %s861
                %s855 = sphi %s845, %s864
                %s856 = sphi %s847, %s865
              $region74: #{tpu_custom_call.1} parent=63 // loop_header_branch
                %853 = sbr.rel (%p850) target = $region78
              $region75: #{tpu_custom_call.1} parent=63 // loop_body
                %v857 = vld [vmem:[%s855] sm:$0xff]
                %858 = vst [vmem:[%s856] sm:$0xff] %v857
                %s859 = sadd.s32 1, %s854
                %p860 = scmp.ge.s32.totalorder %s859, %s842
                %s861 = scalar_select %p860, 0, %s859
                %s862 = smul.u32 %s861, 8
                %s863 = smul.u32 %s861, 8
                %s864 = scalar_lea.vmem %s845, %s862 [#allocation2]
                %s865 = scalar_lea.vmem %s847, %s863
              $region76: #{tpu_custom_call.1} parent=63 // loop_footer
                %s851 = sadd.s32 %s849, 1
              $region77: #{tpu_custom_call.1} parent=63 // loop_footer_branch
                %848 = sbr.rel target = $region73
              $region78: #{tpu_custom_call.1} parent=63 // loop_exit
                _
            $region64: #{tpu_custom_call.1} parent=55 // pred_fallthru
              _
          $region56: #{tpu_custom_call.1} parent=51 // pred_fallthru
            _
          %941 = vnop
        $region52: #{tpu_custom_call.1} parent=47 // pred_fallthru
          _
      $region48: #{tpu_custom_call.1} parent=5 // pred_fallthru
        _
      %p942 = scmp.le.s32.totalorder 2, %s13
      // Predicated region
      $region101: #{tpu_custom_call.1} parent=5 // pred_check
        %p943 = pneg %p942
      $region102: #{tpu_custom_call.1} parent=5 // pred_check_branch
        %945 = sbr.rel (%p943) target = $region104
      $region103: #{tpu_custom_call.1} parent=5 // pred_region
        %s946 = ssub.s32 %s13, 2
        // Predicated region
        $region105: #{tpu_custom_call.1} parent=103 // pred_check
          %p947 = pneg %p194
        $region106: #{tpu_custom_call.1} parent=103 // pred_check_branch
          %949 = sbr.rel (%p947) target = $region108
        $region107: #{tpu_custom_call.1} parent=103 // pred_region
          %s950 = sand.u32 %s179, 1
          %s951 = sand.u32 %s179, 1
          %s952 = smul.addr %s951, 112
          %s953 = scalar_lea.vmem [#allocation2], %s952
        $region108: #{tpu_custom_call.1} parent=103 // pred_fallthru
          _
      $region104: #{tpu_custom_call.1} parent=5 // pred_fallthru
        _
    $region6: #{tpu_custom_call.1} parent=1 // loop_footer
      %s17 = sadd.s32 1, %s13
    $region7: #{tpu_custom_call.1} parent=1 // loop_footer_branch
      %12 = sbr.rel target = $region3
    $region8: #{tpu_custom_call.1} parent=1 // loop_exit
      _

</llo_original>
